<compile_context>
chip_gen: v7x
topology: tpu7x:2x2x1
jax: 0.10.0
libtpu: 0.0.40
codegen_flags: <defaults>
</compile_context>

<pallas_src>
import functools

import jax
import jax.numpy as jnp
from jax.experimental import pallas as pl
from jax.experimental.pallas import tpu as pltpu


def _window_attn_kernel(x_ref, wqkv_ref, bqkv_ref, wproj_ref, bproj_ref,
                        o_ref, *, num_heads, scale, n_valid):
    """Fused qkv proj + per-head softmax(QK^T)V + out proj for one (Bb, Np, C) slab."""
    block_b, n_pad, c = x_ref.shape
    head_dim = c // num_heads

    # ---- QKV projection for the whole slab (bf16 MXU operands, f32 accumulate).
    x2d = x_ref[...].reshape(block_b * n_pad, c)                  # bf16 (Bb*Np, C)
    qkv = jnp.dot(x2d, wqkv_ref[...], preferred_element_type=jnp.float32)
    qkv = (qkv + bqkv_ref[...]).reshape(block_b, n_pad, 3 * c)    # f32 bias add

    # Column layout matches the PyTorch reshape (N, 3, H, hd):
    # [ q(C) | k(C) | v(C) ], heads contiguous inside each block.
    # Split + cast immediately so the f32 qkv value does not stay live.
    q_all = (qkv[..., 0 * c:1 * c] * scale).astype(jnp.bfloat16)  # (Bb, Np, C)
    k_all = qkv[..., 1 * c:2 * c].astype(jnp.bfloat16)
    v_all = qkv[..., 2 * c:3 * c].astype(jnp.bfloat16)

    # Key-padding mask (only generated when N was padded to a multiple of 8).
    if n_valid < n_pad:
        key_idx = jax.lax.broadcasted_iota(jnp.int32, (1, n_pad), 1)
        key_mask = (key_idx < n_valid)[None]                      # (1, 1, Np)
    else:
        key_mask = None

    head_outs = []
    for h in range(num_heads):                                    # short static loop
        sl = slice(h * head_dim, (h + 1) * head_dim)
        q_h = q_all[..., sl]                                      # (Bb, Np, hd)
        k_h = k_all[..., sl]
        v_h = v_all[..., sl]

        # scores = (q*scale) @ k^T, batched over the window/batch slab.
        s = jnp.einsum('bqd,bkd->bqk', q_h, k_h,
                       preferred_element_type=jnp.float32)        # (Bb, Np, Np) f32
        if key_mask is not None:
            s = jnp.where(key_mask, s, -1e30)

        # softmax over the key axis, in f32.
        s = s - jnp.max(s, axis=-1, keepdims=True)
        p = jnp.exp(s)
        p = p * pl.reciprocal(jnp.sum(p, axis=-1, keepdims=True), approx=True)

        o_h = jnp.einsum('bqk,bkd->bqd', p.astype(jnp.bfloat16), v_h,
                         preferred_element_type=jnp.float32)      # (Bb, Np, hd)
        head_outs.append(o_h.astype(jnp.bfloat16))

    # Lane-dense assembly of the context (no per-head masked stores, no scratch).
    ctx = jnp.concatenate(head_outs, axis=-1)                     # (Bb, Np, C) bf16

    # ---- Output projection.
    ctx2d = ctx.reshape(block_b * n_pad, c)
    out = jnp.dot(ctx2d, wproj_ref[...], preferred_element_type=jnp.float32)
    out = out + bproj_ref[...]
    o_ref[...] = out.reshape(block_b, n_pad, c).astype(o_ref.dtype)


def _pick_block_b(batch, n_pad, target_rows=256, max_rows=1024):
    """Largest useful batch-of-windows per grid step (shape-aware)."""
    divisors = [d for d in range(1, batch + 1) if batch % d == 0]
    fitting = [d for d in divisors if d * n_pad <= max_rows] or [1]
    # Smallest block meeting the MXU row target while keeping >=2 grid steps
    # (so v7x's two TensorCores both get work via the "parallel" grid axis).
    good = [d for d in fitting if d * n_pad >= target_rows and batch // d >= 2]
    if good:
        return min(good)
    multi = [d for d in fitting if batch // d >= 2]
    if multi:
        return max(multi)
    return max(fitting)


def window_attention(x, w_qkv, b_qkv, w_proj, b_proj, *, num_heads,
                     block_b=None):
    """x: (B, N, C); weights stored as (in_features, out_features)."""
    B, N, C = x.shape
    assert C % num_heads == 0, "C must be divisible by num_heads"
    head_dim = C // num_heads
    scale = head_dim ** (-0.5)

    # Pad the window length to a sublane multiple so in-kernel reshapes are
    # layout-preserving (DaViT 7x7 windows: N=49 -> 56). Padded keys are masked.
    n_pad = ((N + 7) // 8) * 8
    x_in = x if n_pad == N else jnp.pad(x, ((0, 0), (0, n_pad - N), (0, 0)))

    if block_b is None:
        block_b = _pick_block_b(B, n_pad)
    assert B % block_b == 0, "block_b must divide B"

    out_dtype = x.dtype
    # bf16 matmul operands (halves HBM traffic, native MXU rate); f32 biases.
    x_bf = x_in.astype(jnp.bfloat16)
    wqkv_bf = w_qkv.astype(jnp.bfloat16)
    wproj_bf = w_proj.astype(jnp.bfloat16)
    bqkv_f = b_qkv.astype(jnp.float32).reshape(1, 3 * C)
    bproj_f = b_proj.astype(jnp.float32).reshape(1, C)

    kernel = functools.partial(_window_attn_kernel, num_heads=num_heads,
                               scale=scale, n_valid=N)
    out = pl.pallas_call(
        kernel,
        out_shape=jax.ShapeDtypeStruct((B, n_pad, C), out_dtype),
        grid=(B // block_b,),
        in_specs=[
            pl.BlockSpec((block_b, n_pad, C), lambda i: (i, 0, 0)),
            pl.BlockSpec((C, 3 * C), lambda i: (0, 0)),   # resident weights
            pl.BlockSpec((1, 3 * C), lambda i: (0, 0)),
            pl.BlockSpec((C, C), lambda i: (0, 0)),
            pl.BlockSpec((1, C), lambda i: (0, 0)),
        ],
        out_specs=pl.BlockSpec((block_b, n_pad, C), lambda i: (i, 0, 0)),
        compiler_params=pltpu.CompilerParams(
            dimension_semantics=("parallel",),
            vmem_limit_bytes=64 * 1024 * 1024),
    )(x_bf, wqkv_bf, bqkv_f, wproj_bf, bproj_f)

    if n_pad != N:
        out = out[:, :N, :]
    return out


def window_attention_ref(x, w_qkv, b_qkv, w_proj, b_proj, *, num_heads):
    """Pure-JAX f32 reference mirroring the PyTorch forward exactly."""
    B, N, C = x.shape
    head_dim = C // num_heads
    scale = head_dim ** (-0.5)
    qkv = x @ w_qkv + b_qkv                                  # (B, N, 3C)
    qkv = qkv.reshape(B, N, 3, num_heads, head_dim)
    qkv = jnp.transpose(qkv, (2, 0, 3, 1, 4))                # (3, B, H, N, hd)
    q, k, v = qkv[0], qkv[1], qkv[2]
    attn = (q * scale) @ jnp.swapaxes(k, -1, -2)             # (B, H, N, N)
    attn = jax.nn.softmax(attn, axis=-1)
    out = attn @ v                                           # (B, H, N, hd)
    out = jnp.swapaxes(out, 1, 2).reshape(B, N, C)           # (B, N, C)
    return out @ w_proj + b_proj


def _run_case(key, B, N, C, num_heads):
    kx, kw1, kb1, kw2, kb2 = jax.random.split(key, 5)
    x = jax.random.normal(kx, (B, N, C), dtype=jnp.float32)
    # nn.Linear(dim, 3*dim, bias=True) and nn.Linear(dim, dim), stored as
    # (in_features, out_features) so the kernel computes y = x @ W + b.
    w_qkv = 0.02 * jax.random.normal(kw1, (C, 3 * C), dtype=jnp.float32)
    b_qkv = 0.02 * jax.random.normal(kb1, (3 * C,), dtype=jnp.float32)
    w_proj = 0.02 * jax.random.normal(kw2, (C, C), dtype=jnp.float32)
    b_proj = 0.02 * jax.random.normal(kb2, (C,), dtype=jnp.float32)

    out = window_attention(x, w_qkv, b_qkv, w_proj, b_proj, num_heads=num_heads)
    out = jax.block_until_ready(out)
    ref = window_attention_ref(x, w_qkv, b_qkv, w_proj, b_proj,
                               num_heads=num_heads)
    assert out.shape == (B, N, C)
    # bf16 matmul operands + approx reciprocal vs f32 reference.
    assert jnp.allclose(out, ref, atol=2e-2, rtol=2e-2), (
        f"mismatch B={B} N={N} C={C} H={num_heads}, max abs diff = "
        f"{float(jnp.max(jnp.abs(out - ref)))}")


if __name__ == "__main__":
    key = jax.random.PRNGKey(0)
    k1, k2 = jax.random.split(key)
    # Small aligned case (N multiple of 8).
    _run_case(k1, B=4, N=16, C=64, num_heads=2)
    # Unaligned window length (exercises the N-padding + key-mask path).
    _run_case(k2, B=2, N=12, C=64, num_heads=4)
    print("KERNEL_OK")
</pallas_src>

<mosaic_0001>
module attributes {stable_mosaic.version = 11 : i64} {
  func.func @_window_attn_kernel(%arg0: i32, %arg1: memref<2x16x64xbf16, #tpu.memory_space<vmem>>, %arg2: memref<64x192xbf16, #tpu.memory_space<vmem>>, %arg3: memref<1x192xf32, #tpu.memory_space<vmem>>, %arg4: memref<64x64xbf16, #tpu.memory_space<vmem>>, %arg5: memref<1x64xf32, #tpu.memory_space<vmem>>, %arg6: memref<2x16x64xf32, #tpu.memory_space<vmem>>) attributes {dimension_semantics = [#tpu.dimension_semantics<parallel>], iteration_bounds = array<i64: 2>, scalar_prefetch = 0 : i64, scratch_operands = 0 : i64, tpu.core_type = #tpu.core_type<tc>, window_params = [{transform_indices = @transform_0, window_bounds = array<i64: 2, 16, 64>}, {pipeline_mode = #tpu.pipeline_mode<synchronous>, transform_indices = @transform_1, window_bounds = array<i64: 64, 192>}, {pipeline_mode = #tpu.pipeline_mode<synchronous>, transform_indices = @transform_2, window_bounds = array<i64: 1, 192>}, {pipeline_mode = #tpu.pipeline_mode<synchronous>, transform_indices = @transform_3, window_bounds = array<i64: 64, 64>}, {pipeline_mode = #tpu.pipeline_mode<synchronous>, transform_indices = @transform_4, window_bounds = array<i64: 1, 64>}, {transform_indices = @transform_5, window_bounds = array<i64: 2, 16, 64>}]} {
    %c0 = arith.constant 0 : index
    %c0_0 = arith.constant 0 : index
    %c0_1 = arith.constant 0 : index
    %0 = vector.load %arg1[%c0, %c0_0, %c0_1] : memref<2x16x64xbf16, #tpu.memory_space<vmem>>, vector<2x16x64xbf16>
    %1 = vector.shape_cast %0 : vector<2x16x64xbf16> to vector<32x64xbf16>
    %c0_2 = arith.constant 0 : index
    %c0_3 = arith.constant 0 : index
    %2 = vector.load %arg2[%c0_2, %c0_3] : memref<64x192xbf16, #tpu.memory_space<vmem>>, vector<64x192xbf16>
    %cst = arith.constant dense<0.000000e+00> : vector<32x192xf32>
    %3 = tpu.matmul %1, %2, %cst {dimension_numbers = #tpu.dot_dimension_numbers<[1], [0], [0], [1], [0, 0, 1, 1], [], []>} : vector<32x64xbf16>, vector<64x192xbf16>, vector<32x192xf32> -> vector<32x192xf32>
    %c0_4 = arith.constant 0 : index
    %c0_5 = arith.constant 0 : index
    %4 = vector.load %arg3[%c0_4, %c0_5] : memref<1x192xf32, #tpu.memory_space<vmem>>, vector<1x192xf32>
    %5 = vector.broadcast %4 : vector<1x192xf32> to vector<32x192xf32>
    %6 = arith.addf %3, %5 : vector<32x192xf32>
    %7 = vector.shape_cast %6 : vector<32x192xf32> to vector<2x16x192xf32>
    %8 = vector.extract_strided_slice %7 {offsets = [0, 0, 0], sizes = [2, 16, 64], strides = [1, 1, 1]} : vector<2x16x192xf32> to vector<2x16x64xf32>
    %cst_6 = arith.constant 0.176776692 : f32
    %9 = vector.broadcast %cst_6 : f32 to vector<2x16x64xf32>
    %10 = arith.mulf %8, %9 : vector<2x16x64xf32>
    %11 = arith.truncf %10 : vector<2x16x64xf32> to vector<2x16x64xbf16>
    %12 = vector.extract_strided_slice %7 {offsets = [0, 0, 64], sizes = [2, 16, 64], strides = [1, 1, 1]} : vector<2x16x192xf32> to vector<2x16x64xf32>
    %13 = arith.truncf %12 : vector<2x16x64xf32> to vector<2x16x64xbf16>
    %14 = vector.extract_strided_slice %7 {offsets = [0, 0, 128], sizes = [2, 16, 64], strides = [1, 1, 1]} : vector<2x16x192xf32> to vector<2x16x64xf32>
    %15 = arith.truncf %14 : vector<2x16x64xf32> to vector<2x16x64xbf16>
    %16 = vector.extract_strided_slice %11 {offsets = [0, 0, 0], sizes = [2, 16, 32], strides = [1, 1, 1]} : vector<2x16x64xbf16> to vector<2x16x32xbf16>
    %17 = vector.extract_strided_slice %13 {offsets = [0, 0, 0], sizes = [2, 16, 32], strides = [1, 1, 1]} : vector<2x16x64xbf16> to vector<2x16x32xbf16>
    %18 = vector.extract_strided_slice %15 {offsets = [0, 0, 0], sizes = [2, 16, 32], strides = [1, 1, 1]} : vector<2x16x64xbf16> to vector<2x16x32xbf16>
    "tpu.trace_start"() <{level = 10 : i32, message = "bqd,bkd->bqk"}> : () -> ()
    %cst_7 = arith.constant dense<0.000000e+00> : vector<2x16x16xf32>
    %19 = tpu.matmul %16, %17, %cst_7 {dimension_numbers = #tpu.dot_dimension_numbers<[2], [2], [1], [1], [0, 0, 0, 1, 1, 1], [0], [0]>} : vector<2x16x32xbf16>, vector<2x16x32xbf16>, vector<2x16x16xf32> -> vector<2x16x16xf32>
    "tpu.trace_stop"() : () -> ()
    %cst_8 = arith.constant dense<0xFF800000> : vector<2x16xf32>
    %20 = vector.multi_reduction <maximumf>, %19, %cst_8 [2] : vector<2x16x16xf32> to vector<2x16xf32>
    %21 = vector.shape_cast %20 : vector<2x16xf32> to vector<2x16x1xf32>
    %22 = vector.broadcast %21 : vector<2x16x1xf32> to vector<2x16x16xf32>
    %23 = arith.subf %19, %22 : vector<2x16x16xf32>
    %24 = math.exp %23 : vector<2x16x16xf32>
    %cst_9 = arith.constant dense<0.000000e+00> : vector<2x16xf32>
    %25 = vector.multi_reduction <add>, %24, %cst_9 [2] : vector<2x16x16xf32> to vector<2x16xf32>
    %26 = vector.shape_cast %25 : vector<2x16xf32> to vector<2x16x1xf32>
    %27 = tpu.reciprocal %26 {approx = true} : vector<2x16x1xf32> -> vector<2x16x1xf32>
    %28 = vector.broadcast %27 : vector<2x16x1xf32> to vector<2x16x16xf32>
    %29 = arith.mulf %24, %28 : vector<2x16x16xf32>
    %30 = arith.truncf %29 : vector<2x16x16xf32> to vector<2x16x16xbf16>
    "tpu.trace_start"() <{level = 10 : i32, message = "bqk,bkd->bqd"}> : () -> ()
    %cst_10 = arith.constant dense<0.000000e+00> : vector<2x16x32xf32>
    %31 = tpu.matmul %30, %18, %cst_10 {dimension_numbers = #tpu.dot_dimension_numbers<[2], [1], [1], [2], [0, 0, 0, 1, 1, 2], [0], [0]>} : vector<2x16x16xbf16>, vector<2x16x32xbf16>, vector<2x16x32xf32> -> vector<2x16x32xf32>
    "tpu.trace_stop"() : () -> ()
    %32 = arith.truncf %31 : vector<2x16x32xf32> to vector<2x16x32xbf16>
    %33 = vector.extract_strided_slice %11 {offsets = [0, 0, 32], sizes = [2, 16, 32], strides = [1, 1, 1]} : vector<2x16x64xbf16> to vector<2x16x32xbf16>
    %34 = vector.extract_strided_slice %13 {offsets = [0, 0, 32], sizes = [2, 16, 32], strides = [1, 1, 1]} : vector<2x16x64xbf16> to vector<2x16x32xbf16>
    %35 = vector.extract_strided_slice %15 {offsets = [0, 0, 32], sizes = [2, 16, 32], strides = [1, 1, 1]} : vector<2x16x64xbf16> to vector<2x16x32xbf16>
    "tpu.trace_start"() <{level = 10 : i32, message = "bqd,bkd->bqk"}> : () -> ()
    %cst_11 = arith.constant dense<0.000000e+00> : vector<2x16x16xf32>
    %36 = tpu.matmul %33, %34, %cst_11 {dimension_numbers = #tpu.dot_dimension_numbers<[2], [2], [1], [1], [0, 0, 0, 1, 1, 1], [0], [0]>} : vector<2x16x32xbf16>, vector<2x16x32xbf16>, vector<2x16x16xf32> -> vector<2x16x16xf32>
    "tpu.trace_stop"() : () -> ()
    %cst_12 = arith.constant dense<0xFF800000> : vector<2x16xf32>
    %37 = vector.multi_reduction <maximumf>, %36, %cst_12 [2] : vector<2x16x16xf32> to vector<2x16xf32>
    %38 = vector.shape_cast %37 : vector<2x16xf32> to vector<2x16x1xf32>
    %39 = vector.broadcast %38 : vector<2x16x1xf32> to vector<2x16x16xf32>
    %40 = arith.subf %36, %39 : vector<2x16x16xf32>
    %41 = math.exp %40 : vector<2x16x16xf32>
    %cst_13 = arith.constant dense<0.000000e+00> : vector<2x16xf32>
    %42 = vector.multi_reduction <add>, %41, %cst_13 [2] : vector<2x16x16xf32> to vector<2x16xf32>
    %43 = vector.shape_cast %42 : vector<2x16xf32> to vector<2x16x1xf32>
    %44 = tpu.reciprocal %43 {approx = true} : vector<2x16x1xf32> -> vector<2x16x1xf32>
    %45 = vector.broadcast %44 : vector<2x16x1xf32> to vector<2x16x16xf32>
    %46 = arith.mulf %41, %45 : vector<2x16x16xf32>
    %47 = arith.truncf %46 : vector<2x16x16xf32> to vector<2x16x16xbf16>
    "tpu.trace_start"() <{level = 10 : i32, message = "bqk,bkd->bqd"}> : () -> ()
    %cst_14 = arith.constant dense<0.000000e+00> : vector<2x16x32xf32>
    %48 = tpu.matmul %47, %35, %cst_14 {dimension_numbers = #tpu.dot_dimension_numbers<[2], [1], [1], [2], [0, 0, 0, 1, 1, 2], [0], [0]>} : vector<2x16x16xbf16>, vector<2x16x32xbf16>, vector<2x16x32xf32> -> vector<2x16x32xf32>
    "tpu.trace_stop"() : () -> ()
    %49 = arith.truncf %48 : vector<2x16x32xf32> to vector<2x16x32xbf16>
    %50 = tpu.concatenate %32, %49 in 2 : vector<2x16x32xbf16>, vector<2x16x32xbf16> -> vector<2x16x64xbf16>
    %51 = vector.shape_cast %50 : vector<2x16x64xbf16> to vector<32x64xbf16>
    %c0_15 = arith.constant 0 : index
    %c0_16 = arith.constant 0 : index
    %52 = vector.load %arg4[%c0_15, %c0_16] : memref<64x64xbf16, #tpu.memory_space<vmem>>, vector<64x64xbf16>
    %cst_17 = arith.constant dense<0.000000e+00> : vector<32x64xf32>
    %53 = tpu.matmul %51, %52, %cst_17 {dimension_numbers = #tpu.dot_dimension_numbers<[1], [0], [0], [1], [0, 0, 1, 1], [], []>} : vector<32x64xbf16>, vector<64x64xbf16>, vector<32x64xf32> -> vector<32x64xf32>
    %c0_18 = arith.constant 0 : index
    %c0_19 = arith.constant 0 : index
    %54 = vector.load %arg5[%c0_18, %c0_19] : memref<1x64xf32, #tpu.memory_space<vmem>>, vector<1x64xf32>
    %55 = vector.broadcast %54 : vector<1x64xf32> to vector<32x64xf32>
    %56 = arith.addf %53, %55 : vector<32x64xf32>
    %57 = vector.shape_cast %56 : vector<32x64xf32> to vector<2x16x64xf32>
    %c0_20 = arith.constant 0 : index
    %c0_21 = arith.constant 0 : index
    %c0_22 = arith.constant 0 : index
    %58 = vector.load %arg6[%c0_20, %c0_21, %c0_22] : memref<2x16x64xf32, #tpu.memory_space<vmem>>, vector<2x16x64xf32>
    tpu.vector_store %arg6[%c0_20, %c0_21, %c0_22], %57 {strides = array<i32>} : memref<2x16x64xf32, #tpu.memory_space<vmem>>, vector<2x16x64xf32>,
    return
  }
  func.func @transform_0(%arg0: i32) -> (i32, i32, i32) {
    %c0_i32 = arith.constant 0 : i32
    %c0_i32_0 = arith.constant 0 : i32
    %c0_i32_1 = arith.constant 0 : i32
    return %arg0, %c0_i32, %c0_i32_0 : i32, i32, i32
  }
  func.func @transform_1(%arg0: i32) -> (i32, i32) {
    %c0_i32 = arith.constant 0 : i32
    %c0_i32_0 = arith.constant 0 : i32
    %c0_i32_1 = arith.constant 0 : i32
    return %c0_i32, %c0_i32_0 : i32, i32
  }
  func.func @transform_2(%arg0: i32) -> (i32, i32) {
    %c0_i32 = arith.constant 0 : i32
    %c0_i32_0 = arith.constant 0 : i32
    %c0_i32_1 = arith.constant 0 : i32
    return %c0_i32, %c0_i32_0 : i32, i32
  }
  func.func @transform_3(%arg0: i32) -> (i32, i32) {
    %c0_i32 = arith.constant 0 : i32
    %c0_i32_0 = arith.constant 0 : i32
    %c0_i32_1 = arith.constant 0 : i32
    return %c0_i32, %c0_i32_0 : i32, i32
  }
  func.func @transform_4(%arg0: i32) -> (i32, i32) {
    %c0_i32 = arith.constant 0 : i32
    %c0_i32_0 = arith.constant 0 : i32
    %c0_i32_1 = arith.constant 0 : i32
    return %c0_i32, %c0_i32_0 : i32, i32
  }
  func.func @transform_5(%arg0: i32) -> (i32, i32, i32) {
    %c0_i32 = arith.constant 0 : i32
    %c0_i32_0 = arith.constant 0 : i32
    %c0_i32_1 = arith.constant 0 : i32
    return %arg0, %c0_i32, %c0_i32_0 : i32, i32, i32
  }
}

</mosaic_0001>

<llo_original>
// kernel: tpu_custom_call.1
$region0: #{tpu_custom_call.1}
  #allocation0 [shape = 'u32[]', space=smem, size = 0x4, offset = 0x4, fixed_abs, tag = 'smem constant byte address 0x4 - core index']
  #allocation1 [shape = 'u32[144,128]{1,0:T(1,128)}', space=vmem, size = 0x12000, scoped, tag = 'internal scratch']
  %s0 = inlined_call_operand.hbm [shape: bf16[4,16,64], index: 0, kind: input, shape index: {}]
  %s1 = inlined_call_operand.hbm [shape: bf16[64,192], index: 1, kind: input, shape index: {}]
  %s2 = inlined_call_operand.hbm [shape: f32[1,192], index: 2, kind: input, shape index: {}]
  %s3 = inlined_call_operand.hbm [shape: bf16[64,64], index: 3, kind: input, shape index: {}]
  %s4 = inlined_call_operand.hbm [shape: f32[1,64], index: 4, kind: input, shape index: {}]
  %s5 = inlined_call_operand.hbm [shape: f32[4,16,64], index: 5, kind: output, shape index: {}]
  %s6 = sld [smem:[#allocation0]]
  $region73: #{tpu_custom_call.1} parent=0
    _
  %s8 = ssub.s32 1, %s6
  %s9 = scalar_select 0, %s8, %s6
  $region1: #{tpu_custom_call.1} parent=0
    #allocation2 [shape = 'u8[16384]{0}', space=vmem, size = 0x4000, scoped, tag = 'input window, operand 0']
    #allocation3 [shape = 's32[2]{0}', space=sflag, size = 0x8, scoped, tag = 'scoped memory for tpu_custom_call.1']
    #allocation4 [shape = 's32[2]{0}', space=sflag, size = 0x8, scoped, tag = 'scoped memory for tpu_custom_call.1']
    #allocation5 [shape = 'u8[32768]{0}', space=vmem, size = 0x8000, scoped, tag = 'input window, operand 1, single buffered']
    #allocation6 [shape = 's32[1]{0}', space=sflag, size = 0x4, scoped, tag = 'scoped memory for tpu_custom_call.1']
    #allocation7 [shape = 'u8[1024]{0}', space=vmem, size = 0x400, scoped, tag = 'input window, operand 2, single buffered']
    #allocation8 [shape = 'u8[16384]{0}', space=vmem, size = 0x4000, scoped, tag = 'input window, operand 3, single buffered']
    #allocation9 [shape = 's32[1]{0}', space=sflag, size = 0x4, scoped, tag = 'scoped memory for tpu_custom_call.1']
    #allocation10 [shape = 'u8[512]{0}', space=vmem, size = 0x400, scoped, tag = 'input window, operand 4, single buffered']
    #allocation11 [shape = 'u8[32768]{0}', space=vmem, size = 0x8000, scoped, tag = 'output window, operand 0']
    %10 = vsyncpa [#allocation3], 0
    %s11 = scalar_lea.sflag [#allocation3], 1
    %12 = vsyncpa %s11, 0
    %13 = vsyncpa [#allocation6], 0
    %14 = vsyncpa [#allocation9], 0
    %15 = vsyncpa [#allocation4], 0
    %s16 = scalar_lea.sflag [#allocation4], 1
    %17 = vsyncpa %s16, 0
    loop: start=0, step=1, limit=4
    $region2: #{tpu_custom_call.1} parent=1 // loop_pre_header
      _
    $region3: #{tpu_custom_call.1} parent=1 // loop_header
      %s19 = sphi 0, %s23
      %p20 = scmp.ge.s32.totalorder %s19, 4
      %s29 = sphi 0, %s31
      %s32 = sphi 0, %s29
      %s33 = sphi 0, %s32
      %s49 = sphi 0, %s33
      %s53 = sphi 0, %s53
      %s55 = sphi 0, %s53
      %s56 = sphi 0, %s55
      %s70 = sphi 0, %s56
      %s74 = sphi 0, %s74
      %s76 = sphi 0, %s74
      %s77 = sphi 0, %s76
      %s91 = sphi 0, %s77
      %s95 = sphi 0, %s95
      %s97 = sphi 0, %s95
      %s98 = sphi 0, %s97
      %s112 = sphi 0, %s98
      %s116 = sphi 0, %s116
      %s118 = sphi 0, %s116
      %s119 = sphi 0, %s118
      %s133 = sphi 0, %s119
      %s139 = sphi 0, %s141
      %s142 = sphi 0, %s139
      %s143 = sphi 0, %s142
      %s159 = sphi 0, %s143
    $region4: #{tpu_custom_call.1} parent=1 // loop_header_branch
      %22 = sbr.rel (%p20) target = $region8
    $region5: #{tpu_custom_call.1} parent=1 // loop_body
      %s24 = ssub.s32 %s19, 1
      %s25 = ssub.s32 %s19, 2
      %s26 = sadd.s32 %s19, 1
      %s27 = ssub.s32 %s19, %s26
      %p28 = scmp.eq.s32.totalorder %s27, 0
      %s30 = sadd.s32 %s29, 1
      %s31 = scalar_select %p28, %s29, %s30
      %p34 = pneg %p28
      %p35 = scmp.eq.s32.totalorder %s19, 1
      %p36 = por %p34, %p35
      %p37 = scmp.ne.s32.totalorder %s29, %s32
      %p38 = scmp.eq.s32.totalorder %s19, 0
      %p39 = por %p37, %p38
      %p40 = scmp.ne.s32.totalorder %s29, %s32
      %p41 = scmp.eq.s32.totalorder %s24, 1
      %p42 = por %p40, %p41
      %p43 = scmp.ne.s32.totalorder %s32, %s33
      %p44 = scmp.eq.s32.totalorder %s24, 0
      %p45 = por %p43, %p44
      %p46 = scmp.ne.s32.totalorder %s32, %s33
      %p47 = scmp.eq.s32.totalorder %s25, 1
      %p48 = por %p46, %p47
      %p50 = scmp.ne.s32.totalorder %s33, %s49
      %p51 = scmp.eq.s32.totalorder %s25, 0
      %p52 = por %p50, %p51
      %s54 = sadd.s32 %s53, 1
      %p57 = scmp.eq.s32.totalorder %s19, 1
      %p58 = scmp.ne.s32.totalorder %s53, %s55
      %p59 = scmp.eq.s32.totalorder %s19, 0
      %p60 = por %p58, %p59
      %p61 = scmp.ne.s32.totalorder %s53, %s55
      %p62 = scmp.eq.s32.totalorder %s24, 1
      %p63 = por %p61, %p62
      %p64 = scmp.ne.s32.totalorder %s55, %s56
      %p65 = scmp.eq.s32.totalorder %s24, 0
      %p66 = por %p64, %p65
      %p67 = scmp.ne.s32.totalorder %s55, %s56
      %p68 = scmp.eq.s32.totalorder %s25, 1
      %p69 = por %p67, %p68
      %p71 = scmp.ne.s32.totalorder %s56, %s70
      %p72 = scmp.eq.s32.totalorder %s25, 0
      %p73 = por %p71, %p72
      %s75 = sadd.s32 %s74, 1
      %p78 = scmp.eq.s32.totalorder %s19, 1
      %p79 = scmp.ne.s32.totalorder %s74, %s76
      %p80 = scmp.eq.s32.totalorder %s19, 0
      %p81 = por %p79, %p80
      %p82 = scmp.ne.s32.totalorder %s74, %s76
      %p83 = scmp.eq.s32.totalorder %s24, 1
      %p84 = por %p82, %p83
      %p85 = scmp.ne.s32.totalorder %s76, %s77
      %p86 = scmp.eq.s32.totalorder %s24, 0
      %p87 = por %p85, %p86
      %p88 = scmp.ne.s32.totalorder %s76, %s77
      %p89 = scmp.eq.s32.totalorder %s25, 1
      %p90 = por %p88, %p89
      %p92 = scmp.ne.s32.totalorder %s77, %s91
      %p93 = scmp.eq.s32.totalorder %s25, 0
      %p94 = por %p92, %p93
      %s96 = sadd.s32 %s95, 1
      %p99 = scmp.eq.s32.totalorder %s19, 1
      %p100 = scmp.ne.s32.totalorder %s95, %s97
      %p101 = scmp.eq.s32.totalorder %s19, 0
      %p102 = por %p100, %p101
      %p103 = scmp.ne.s32.totalorder %s95, %s97
      %p104 = scmp.eq.s32.totalorder %s24, 1
      %p105 = por %p103, %p104
      %p106 = scmp.ne.s32.totalorder %s97, %s98
      %p107 = scmp.eq.s32.totalorder %s24, 0
      %p108 = por %p106, %p107
      %p109 = scmp.ne.s32.totalorder %s97, %s98
      %p110 = scmp.eq.s32.totalorder %s25, 1
      %p111 = por %p109, %p110
      %p113 = scmp.ne.s32.totalorder %s98, %s112
      %p114 = scmp.eq.s32.totalorder %s25, 0
      %p115 = por %p113, %p114
      %s117 = sadd.s32 %s116, 1
      %p120 = scmp.eq.s32.totalorder %s19, 1
      %p121 = scmp.ne.s32.totalorder %s116, %s118
      %p122 = scmp.eq.s32.totalorder %s19, 0
      %p123 = por %p121, %p122
      %p124 = scmp.ne.s32.totalorder %s116, %s118
      %p125 = scmp.eq.s32.totalorder %s24, 1
      %p126 = por %p124, %p125
      %p127 = scmp.ne.s32.totalorder %s118, %s119
      %p128 = scmp.eq.s32.totalorder %s24, 0
      %p129 = por %p127, %p128
      %p130 = scmp.ne.s32.totalorder %s118, %s119
      %p131 = scmp.eq.s32.totalorder %s25, 1
      %p132 = por %p130, %p131
      %p134 = scmp.ne.s32.totalorder %s119, %s133
      %p135 = scmp.eq.s32.totalorder %s25, 0
      %p136 = por %p134, %p135
      %s137 = ssub.s32 %s19, %s26
      %p138 = scmp.eq.s32.totalorder %s137, 0
      %s140 = sadd.s32 %s139, 1
      %s141 = scalar_select %p138, %s139, %s140
      %p144 = pneg %p138
      %p145 = scmp.eq.s32.totalorder %s19, 1
      %p146 = por %p144, %p145
      %p147 = scmp.ne.s32.totalorder %s139, %s142
      %p148 = scmp.eq.s32.totalorder %s19, 0
      %p149 = por %p147, %p148
      %p150 = scmp.ne.s32.totalorder %s139, %s142
      %p151 = scmp.eq.s32.totalorder %s24, 1
      %p152 = por %p150, %p151
      %p153 = scmp.ne.s32.totalorder %s142, %s143
      %p154 = scmp.eq.s32.totalorder %s24, 0
      %p155 = por %p153, %p154
      %p156 = scmp.ne.s32.totalorder %s142, %s143
      %p157 = scmp.eq.s32.totalorder %s25, 1
      %p158 = por %p156, %p157
      %p160 = scmp.ne.s32.totalorder %s143, %s159
      %p161 = scmp.eq.s32.totalorder %s25, 0
      %p162 = por %p160, %p161
      %p163 = scmp.le.s32.totalorder 1, %s19
      %p164 = scmp.lt.s32.totalorder %s19, 3
      %p165 = pnand %p163, %p164
      %p166 = pneg %p165
      // Predicated region
      $region9: #{tpu_custom_call.1} parent=5 // pred_check
        _
      $region10: #{tpu_custom_call.1} parent=5 // pred_check_branch
        %168 = sbr.rel (%p165) target = $region12
      $region11: #{tpu_custom_call.1} parent=5 // pred_region
        %s169 = ssub.s32 %s19, 1
        // Predicated region
        $region13: #{tpu_custom_call.1} parent=11 // pred_check
          %p170 = pneg %p66
        $region14: #{tpu_custom_call.1} parent=11 // pred_check_branch
          %172 = sbr.rel (%p170) target = $region16
        $region15: #{tpu_custom_call.1} parent=11 // pred_region
          %s174 = ssub.s32 1024, 1024
          %175 = vsyncadd [#allocation6], %s174
          %s176 = sshll.u32 [#allocation5], 4
          %s177 = int_to_ptr.vmem [resolvable:$true] %s176
          %182 = dma.hbm_to_vmem [thread:$0]  %s1, 1024, %s177, [#allocation6], 128, 128, 8
        $region16: #{tpu_custom_call.1} parent=11 // pred_fallthru
          _
        // Predicated region
        $region17: #{tpu_custom_call.1} parent=11 // pred_check
          %p183 = pneg %p87
        $region18: #{tpu_custom_call.1} parent=11 // pred_check_branch
          %185 = sbr.rel (%p183) target = $region20
        $region19: #{tpu_custom_call.1} parent=11 // pred_region
          %s187 = ssub.s32 32, 32
          %188 = vsyncadd [#allocation6], %s187
          %s190 = sshll.u32 [#allocation7], 4
          %s191 = int_to_ptr.vmem [resolvable:$true] %s190
          %193 = dma.hbm_to_vmem [thread:$0]  %s2, 32, %s191, [#allocation6]
        $region20: #{tpu_custom_call.1} parent=11 // pred_fallthru
          _
        // Predicated region
        $region21: #{tpu_custom_call.1} parent=11 // pred_check
          %p194 = pneg %p108
        $region22: #{tpu_custom_call.1} parent=11 // pred_check_branch
          %196 = sbr.rel (%p194) target = $region24
        $region23: #{tpu_custom_call.1} parent=11 // pred_region
          %s198 = ssub.s32 512, 512
          %199 = vsyncadd [#allocation9], %s198
          %s200 = sshll.u32 [#allocation8], 4
          %s201 = int_to_ptr.vmem [resolvable:$true] %s200
          %206 = dma.hbm_to_vmem [thread:$0]  %s3, 512, %s201, [#allocation9], 64, 64, 4
        $region24: #{tpu_custom_call.1} parent=11 // pred_fallthru
          _
        // Predicated region
        $region25: #{tpu_custom_call.1} parent=11 // pred_check
          %p207 = pneg %p129
        $region26: #{tpu_custom_call.1} parent=11 // pred_check_branch
          %209 = sbr.rel (%p207) target = $region28
        $region27: #{tpu_custom_call.1} parent=11 // pred_region
          %s211 = ssub.s32 16, 16
          %212 = vsyncadd [#allocation9], %s211
          %s214 = sshll.u32 [#allocation10], 4
          %s215 = int_to_ptr.vmem [resolvable:$true] %s214
          %217 = dma.hbm_to_vmem [thread:$0]  %s4, 16, %s215, [#allocation9]
        $region28: #{tpu_custom_call.1} parent=11 // pred_fallthru
          _
      $region12: #{tpu_custom_call.1} parent=5 // pred_fallthru
        _
      %p218 = scmp.lt.s32.totalorder %s19, 2
      // Predicated region
      $region29: #{tpu_custom_call.1} parent=5 // pred_check
        %p219 = pneg %p218
      $region30: #{tpu_custom_call.1} parent=5 // pred_check_branch
        %221 = sbr.rel (%p219) target = $region32
      $region31: #{tpu_custom_call.1} parent=5 // pred_region
        // Predicated region
        $region33: #{tpu_custom_call.1} parent=31 // pred_check
          %p222 = pneg %p39
        $region34: #{tpu_custom_call.1} parent=31 // pred_check_branch
          %224 = sbr.rel (%p222) target = $region36
        $region35: #{tpu_custom_call.1} parent=31 // pred_region
          %s225 = sand.u32 %s29, 1
          %s226 = scalar_lea.sflag [#allocation3], %s225
          %s227 = sand.u32 %s29, 1
          %s228 = smul.addr %s227, 16
          %s229 = scalar_lea.vmem [#allocation2], %s228
          %s230 = smul.u32 2, %s19
          %s232 = ssub.s32 256, 256
          %233 = vsyncadd %s226, %s232
          %s234 = smul.addr %s230, 2
          %s235 = smul.addr %s234, 64
          %s236 = scalar_lea.hbm %s0, %s235
          %s237 = sshll.u32 %s229, 4
          %s238 = int_to_ptr.vmem [resolvable:$true] %s237
          %243 = dma.hbm_to_vmem [thread:$0]  %s236, 256, %s238, %s226, 64, 64, 4
        $region36: #{tpu_custom_call.1} parent=31 // pred_fallthru
          _
      $region32: #{tpu_custom_call.1} parent=5 // pred_fallthru
        _
      %p244 = scmp.le.s32.totalorder 1, %s19
      %p245 = scmp.lt.s32.totalorder %s19, 3
      %p246 = pnand %p244, %p245
      %p247 = pneg %p246
      // Predicated region
      $region37: #{tpu_custom_call.1} parent=5 // pred_check
        _
      $region38: #{tpu_custom_call.1} parent=5 // pred_check_branch
        %249 = sbr.rel (%p246) target = $region40
      $region39: #{tpu_custom_call.1} parent=5 // pred_region
        %s250 = ssub.s32 %s19, 1
        %s251 = sand.u32 %s32, 1
        %s252 = scalar_lea.sflag [#allocation3], %s251
        %s253 = sand.u32 %s32, 1
        %s254 = smul.addr %s253, 16
        %s255 = scalar_lea.vmem [#allocation2], %s254
        // Predicated region
        $region41: #{tpu_custom_call.1} parent=39 // pred_check
          %p256 = pneg %p45
        $region42: #{tpu_custom_call.1} parent=39 // pred_check_branch
          %258 = sbr.rel (%p256) target = $region44
        $region43: #{tpu_custom_call.1} parent=39 // pred_region
          %259 = dma.done %s252, 256
        $region44: #{tpu_custom_call.1} parent=39 // pred_fallthru
          _
        // Predicated region
        $region45: #{tpu_custom_call.1} parent=39 // pred_check
          %p260 = pneg %p66
        $region46: #{tpu_custom_call.1} parent=39 // pred_check_branch
          %262 = sbr.rel (%p260) target = $region48
        $region47: #{tpu_custom_call.1} parent=39 // pred_region
          %263 = dma.done [#allocation6], 1024
        $region48: #{tpu_custom_call.1} parent=39 // pred_fallthru
          _
        // Predicated region
        $region49: #{tpu_custom_call.1} parent=39 // pred_check
          %p264 = pneg %p87
        $region50: #{tpu_custom_call.1} parent=39 // pred_check_branch
          %266 = sbr.rel (%p264) target = $region52
        $region51: #{tpu_custom_call.1} parent=39 // pred_region
          %267 = dma.done [#allocation6], 32
        $region52: #{tpu_custom_call.1} parent=39 // pred_fallthru
          _
        // Predicated region
        $region53: #{tpu_custom_call.1} parent=39 // pred_check
          %p268 = pneg %p108
        $region54: #{tpu_custom_call.1} parent=39 // pred_check_branch
          %270 = sbr.rel (%p268) target = $region56
        $region55: #{tpu_custom_call.1} parent=39 // pred_region
          %271 = dma.done [#allocation9], 512
        $region56: #{tpu_custom_call.1} parent=39 // pred_fallthru
          _
        // Predicated region
        $region57: #{tpu_custom_call.1} parent=39 // pred_check
          %p272 = pneg %p129
        $region58: #{tpu_custom_call.1} parent=39 // pred_check_branch
          %274 = sbr.rel (%p272) target = $region60
        $region59: #{tpu_custom_call.1} parent=39 // pred_region
          %275 = dma.done [#allocation9], 16
        $region60: #{tpu_custom_call.1} parent=39 // pred_fallthru
          _
        %s276 = sand.u32 %s32, 1
        %s277 = scalar_lea.sflag [#allocation3], %s276
        %s278 = sand.u32 %s32, 1
        %s279 = smul.addr %s278, 16
        %s280 = scalar_lea.vmem [#allocation2], %s279
        %p281 = pneg %p45
        %p282 = pneg %p42
        %p283 = pneg %p66
        %p284 = pneg %p63
        %p285 = pneg %p87
        %p286 = pneg %p84
        %p287 = pneg %p108
        %p288 = pneg %p105
        %p289 = pneg %p129
        %p290 = pneg %p126
        %p291 = pneg %p155
        %p292 = pneg %p152
        %s293 = sand.u32 %s142, 1
        %s294 = scalar_lea.sflag [#allocation4], %s293
        %s295 = sand.u32 %s142, 1
        %s296 = smul.addr %s295, 32
        %s297 = scalar_lea.vmem [#allocation11], %s296
        %s298 = smul.u32 2, %s24
        %s299 = smul.u32 2, %s24
        %v301 = vld [vmem:[%s255] sm:$0xf]
        %v302 = vld [vmem:[%s255 + $0x4] sm:$0xf]
        %v303 = vld [vmem:[%s255 + $0x8] sm:$0xf]
        %v304 = vld [vmem:[%s255 + $0xc] sm:$0xf]
        %v305 = vld [vmem:[#allocation5] sm:$0xff]
        %v306 = vld [vmem:[#allocation5 + $0x8] sm:$0xff]
        %v307 = vld [vmem:[#allocation5 + $0x10] sm:$0xff]
        %v308 = vld [vmem:[#allocation5 + $0x18] sm:$0xff]
        %v309 = vld [vmem:[#allocation5 + $0x20] sm:$0xff]
        %v310 = vld [vmem:[#allocation5 + $0x28] sm:$0xff]
        %v311 = vld [vmem:[#allocation5 + $0x30] sm:$0xff]
        %v312 = vld [vmem:[#allocation5 + $0x38] sm:$0xff]
        %v313 = vld [vmem:[#allocation7] sm:$0x3]
        %v315 = vlaneseq
        %v316 = vshrl.u32 %v315, 7
        %v317 = vsub.s32 0, %v316
        %v318 = vrot.slane %v313, %v317
        %v319 = vlaneseq
        %v320 = vshrl.u32 %v319, 7
        %v321 = vsub.s32 1, %v320
        %v322 = vrot.slane %v313, %v321
        %v329 = vunpack.c.l.b16 %v301
        %v330 = vunpack.c.l.b16 %v302
        %v331 = vunpack.c.l.b16 %v303
        %v332 = vunpack.c.l.b16 %v304
        %v333 = vpack.c.b16 %v330, %v329
        %v334 = vpack.c.b16 %v332, %v331
        %v343 = vunpack.c.l.b16 %v305
        %v344 = vunpack.c.h.b16 %v305
        %v345 = vunpack.c.l.b16 %v306
        %v346 = vunpack.c.h.b16 %v306
        %v347 = vunpack.c.l.b16 %v307
        %v348 = vunpack.c.h.b16 %v307
        %v349 = vunpack.c.l.b16 %v308
        %v350 = vunpack.c.h.b16 %v308
        %v351 = vunpack.c.l.b16 %v309
        %v352 = vunpack.c.h.b16 %v309
        %v353 = vunpack.c.l.b16 %v310
        %v354 = vunpack.c.h.b16 %v310
        %v355 = vunpack.c.l.b16 %v311
        %v356 = vunpack.c.h.b16 %v311
        %v357 = vunpack.c.l.b16 %v312
        %v358 = vunpack.c.h.b16 %v312
        %v359 = vpack.c.b16 %v345, %v343
        %v360 = vpack.c.b16 %v346, %v344
        %v361 = vpack.c.b16 %v349, %v347
        %v362 = vpack.c.b16 %v350, %v348
        %v363 = vpack.c.b16 %v353, %v351
        %v364 = vpack.c.b16 %v354, %v352
        %v365 = vpack.c.b16 %v357, %v355
        %v366 = vpack.c.b16 %v358, %v356
        %vm375 = vcmask 523264
        %v377 = vsel %vm375, %v333, 0
        %v380 = vsel %vm375, %v334, 0
        %382 = vmatprep.subr.bf16.mxu0 %v360
        %383 = vmatpush1.bf16.msra.mxu0 %v359
        %384 = vmatprep.subr.bf16.mxu0 %v362
        %385 = vmatpush1.bf16.msra.mxu0 %v361
        %386 = vmatprep.subr.bf16.mxu0 %v364
        %387 = vmatpush1.bf16.msra.mxu0 %v363
        %388 = vmatprep.subr.bf16.mxu0 %v366
        %389 = vmatpush1.bf16.msra.mxu0 %v365
        %390 = vmatprep.subr.bf16.mxu0 0
        %391 = vmatpush1.bf16.msra.mxu0 0
        %392 = vmatprep.subr.bf16.mxu0 0
        %393 = vmatpush1.bf16.msra.mxu0 0
        %394 = vmatprep.subr.bf16.mxu0 0
        %395 = vmatpush1.bf16.msra.mxu0 0
        %396 = vmatprep.subr.bf16.mxu0 0
        %397 = vmatpush1.bf16.msra.mxu0 0
        %398 = vmatprep.subr.bf16.mxu0 0
        %399 = vmatpush1.bf16.msra.mxu0 0
        %400 = vmatprep.subr.bf16.mxu0 0
        %401 = vmatpush1.bf16.msra.mxu0 0
        %402 = vmatprep.subr.bf16.mxu0 0
        %403 = vmatpush1.bf16.msra.mxu0 0
        %404 = vmatprep.subr.bf16.mxu0 0
        %405 = vmatpush1.bf16.msra.mxu0 0
        %406 = vmatprep.subr.bf16.mxu0 0
        %407 = vmatpush1.bf16.msra.mxu0 0
        %408 = vmatprep.subr.bf16.mxu0 0
        %409 = vmatpush1.bf16.msra.mxu0 0
        %410 = vmatprep.subr.bf16.mxu0 0
        %411 = vmatpush1.bf16.msra.mxu0 0
        %412 = vmatprep.subr.bf16.mxu0 0
        %413 = vmatpush1.bf16.msra.mxu0 0
        %414 = vmatprep.mubr.bf16.mxu0 0
        %415 = vmatmul.mubr.bf16.gmra.mrb[0].mxu0 %v377
        %v416 = vpop.f32.mrb[0].mxu0
        %v417 = vadd.f32 %v318, %v416
        %v418 = vpop.f32.mrb[0].mxu0
        %v419 = vadd.f32 %v322, %v418
        %v420 = vpop.f32.mrb[0].mxu0
        %v421 = vadd.f32 %v318, %v420
        %v422 = vpop.f32.mrb[0].mxu0
        %v423 = vadd.f32 %v322, %v422
        %424 = vmatprep.mubr.bf16.mxu0 0
        %425 = vmatmul.mubr.bf16.gmra.mrb[0].mxu0 %v380
        %v426 = vpop.f32.mrb[0].mxu0
        %v427 = vadd.f32 %v318, %v426
        %v428 = vpop.f32.mrb[0].mxu0
        %v429 = vadd.f32 %v322, %v428
        %v430 = vpop.f32.mrb[0].mxu0
        %v431 = vadd.f32 %v318, %v430
        %v432 = vpop.f32.mrb[0].mxu0
        %v433 = vadd.f32 %v322, %v432
        %434 = vdwg.mxu0
        %v435 = vmul.f32 %v417, 0.17677669
        %v436 = vmul.f32 %v421, 0.17677669
        %v437 = vmul.f32 %v427, 0.17677669
        %v438 = vmul.f32 %v431, 0.17677669
        %v439 = vpack.c.bf16 %v436, %v435
        %v440 = vpack.c.bf16 %v438, %v437
        %v441 = vpack.c.bf16 %v421, %v417
        %v442 = vpack.c.bf16 %v431, %v427
        %v443 = vpack.c.bf16 %v423, %v419
        %v444 = vpack.c.bf16 %v433, %v429
        %446 = vrot.lane.b32.xlu0 %v441, 64
        %v447 = vpop.permute.xlu0 %446
        %vm448 = vcmask 261120
        %v450 = vsel %vm448, %v439, 0
        %v453 = vsel %vm448, %v447, 0
        %455 = vmatprep.subr.bf16.mxu0 0
        %456 = vmatpush1.bf16.xpose.msra.mxu0 %v453
        %457 = vmatprep.subr.bf16.mxu0 0
        %458 = vmatpush1.bf16.xpose.msra.mxu0 0
        %459 = vmatprep.subr.bf16.mxu0 0
        %460 = vmatpush1.bf16.xpose.msra.mxu0 0
        %461 = vmatprep.subr.bf16.mxu0 0
        %462 = vmatpush1.bf16.xpose.msra.mxu0 0
        %463 = vmatprep.subr.bf16.mxu0 0
        %464 = vmatpush1.bf16.xpose.msra.mxu0 0
        %465 = vmatprep.subr.bf16.mxu0 0
        %466 = vmatpush1.bf16.xpose.msra.mxu0 0
        %467 = vmatprep.subr.bf16.mxu0 0
        %468 = vmatpush1.bf16.xpose.msra.mxu0 0
        %469 = vmatprep.subr.bf16.mxu0 0
        %470 = vmatpush1.bf16.xpose.msra.mxu0 0
        %471 = vmatprep.subr.bf16.mxu0 0
        %472 = vmatpush1.bf16.xpose.msra.mxu0 0
        %473 = vmatprep.subr.bf16.mxu0 0
        %474 = vmatpush1.bf16.xpose.msra.mxu0 0
        %475 = vmatprep.subr.bf16.mxu0 0
        %476 = vmatpush1.bf16.xpose.msra.mxu0 0
        %477 = vmatprep.subr.bf16.mxu0 0
        %478 = vmatpush1.bf16.xpose.msra.mxu0 0
        %479 = vmatprep.subr.bf16.mxu0 0
        %480 = vmatpush1.bf16.xpose.msra.mxu0 0
        %481 = vmatprep.subr.bf16.mxu0 0
        %482 = vmatpush1.bf16.xpose.msra.mxu0 0
        %483 = vmatprep.subr.bf16.mxu0 0
        %484 = vmatpush1.bf16.xpose.msra.mxu0 0
        %485 = vmatprep.subr.bf16.mxu0 0
        %486 = vmatpush1.bf16.xpose.msra.mxu0 0
        %487 = vmatprep.mubr.bf16.mxu0 0
        %488 = vmatmul.mubr.bf16.gmra.mrb[0].mxu0 %v450
        %v489 = vpop.f32.mrb[0].mxu0
        %v490 = vadd.f32 0.0, %v489
        %v491 = vpop.f32.mrb[0].mxu0
        %v492 = vpop.f32.mrb[0].mxu0
        %v493 = vadd.f32 0.0, %v492
        %v494 = vpop.f32.mrb[0].mxu0
        %495 = vdwg.mxu0
        %497 = vrot.lane.b32.xlu0 %v442, 64
        %v498 = vpop.permute.xlu0 %497
        %v500 = vsel %vm448, %v440, 0
        %v503 = vsel %vm448, %v498, 0
        %505 = vmatprep.subr.bf16.mxu0 0
        %506 = vmatpush1.bf16.xpose.msra.mxu0 %v503
        %507 = vmatprep.subr.bf16.mxu0 0
        %508 = vmatpush1.bf16.xpose.msra.mxu0 0
        %509 = vmatprep.subr.bf16.mxu0 0
        %510 = vmatpush1.bf16.xpose.msra.mxu0 0
        %511 = vmatprep.subr.bf16.mxu0 0
        %512 = vmatpush1.bf16.xpose.msra.mxu0 0
        %513 = vmatprep.subr.bf16.mxu0 0
        %514 = vmatpush1.bf16.xpose.msra.mxu0 0
        %515 = vmatprep.subr.bf16.mxu0 0
        %516 = vmatpush1.bf16.xpose.msra.mxu0 0
        %517 = vmatprep.subr.bf16.mxu0 0
        %518 = vmatpush1.bf16.xpose.msra.mxu0 0
        %519 = vmatprep.subr.bf16.mxu0 0
        %520 = vmatpush1.bf16.xpose.msra.mxu0 0
        %521 = vmatprep.subr.bf16.mxu0 0
        %522 = vmatpush1.bf16.xpose.msra.mxu0 0
        %523 = vmatprep.subr.bf16.mxu0 0
        %524 = vmatpush1.bf16.xpose.msra.mxu0 0
        %525 = vmatprep.subr.bf16.mxu0 0
        %526 = vmatpush1.bf16.xpose.msra.mxu0 0
        %527 = vmatprep.subr.bf16.mxu0 0
        %528 = vmatpush1.bf16.xpose.msra.mxu0 0
        %529 = vmatprep.subr.bf16.mxu0 0
        %530 = vmatpush1.bf16.xpose.msra.mxu0 0
        %531 = vmatprep.subr.bf16.mxu0 0
        %532 = vmatpush1.bf16.xpose.msra.mxu0 0
        %533 = vmatprep.subr.bf16.mxu0 0
        %534 = vmatpush1.bf16.xpose.msra.mxu0 0
        %535 = vmatprep.subr.bf16.mxu0 0
        %536 = vmatpush1.bf16.xpose.msra.mxu0 0
        %537 = vmatprep.mubr.bf16.mxu0 0
        %538 = vmatmul.mubr.bf16.gmra.mrb[0].mxu0 %v500
        %v539 = vpop.f32.mrb[0].mxu0
        %v540 = vadd.f32 0.0, %v539
        %v541 = vpop.f32.mrb[0].mxu0
        %v542 = vpop.f32.mrb[0].mxu0
        %v543 = vadd.f32 0.0, %v542
        %v544 = vpop.f32.mrb[0].mxu0
        %545 = vdwg.mxu0
        %vm546 = vcmask 130048
        %v547 = vsel %vm546, %v490, -inf
        %548 = vmax.xlane.f32.xlu0 %v547
        %v549 = vpop.xlane.xlu0 %548
        %v550 = vsel %vm546, %v493, -inf
        %551 = vmax.xlane.f32.xlu0 %v550
        %v552 = vpop.xlane.xlu0 %551
        %v553 = vsel %vm546, %v540, -inf
        %554 = vmax.xlane.f32.xlu0 %v553
        %v555 = vpop.xlane.xlu0 %554
        %v556 = vsel %vm546, %v543, -inf
        %557 = vmax.xlane.f32.xlu0 %v556
        %v558 = vpop.xlane.xlu0 %557
        %v559 = vsub.f32 %v490, %v549
        %v560 = vsub.f32 %v493, %v552
        %v561 = vsub.f32 %v540, %v555
        %v562 = vsub.f32 %v543, %v558
        %v563 = vmul.f32 %v559, 1.442695
        %v564 = vpow.pop %v563
        %v565 = vmul.f32 %v560, 1.442695
        %v566 = vpow.pop %v565
        %v567 = vmul.f32 %v561, 1.442695
        %v568 = vpow.pop %v567
        %v569 = vmul.f32 %v562, 1.442695
        %v570 = vpow.pop %v569
        %v571 = vsel %vm546, %v564, 0.0
        %572 = vadd.xlane.f32.xlu0 %v571
        %v573 = vpop.xlane.xlu0 %572
        %v574 = vsel %vm546, %v566, 0.0
        %575 = vadd.xlane.f32.xlu0 %v574
        %v576 = vpop.xlane.xlu0 %575
        %v577 = vsel %vm546, %v568, 0.0
        %578 = vadd.xlane.f32.xlu0 %v577
        %v579 = vpop.xlane.xlu0 %578
        %v580 = vsel %vm546, %v570, 0.0
        %581 = vadd.xlane.f32.xlu0 %v580
        %v582 = vpop.xlane.xlu0 %581
        %v583 = vrcp.pop %v573
        %v584 = vrcp.pop %v576
        %v585 = vrcp.pop %v579
        %v586 = vrcp.pop %v582
        %v587 = vmul.f32 %v564, %v583
        %v588 = vmul.f32 %v566, %v584
        %v589 = vmul.f32 %v568, %v585
        %v590 = vmul.f32 %v570, %v586
        %v591 = vpack.c.bf16 %v588, %v587
        %v592 = vpack.c.bf16 %v590, %v589
        %v594 = vsel %vm546, %v591, 0
        %596 = vmatprep.subr.bf16.mxu0 0
        %597 = vmatpush1.bf16.msra.mxu0 %v443
        %598 = vmatprep.subr.bf16.mxu0 0
        %599 = vmatpush1.bf16.msra.mxu0 0
        %600 = vmatprep.subr.bf16.mxu0 0
        %601 = vmatpush1.bf16.msra.mxu0 0
        %602 = vmatprep.subr.bf16.mxu0 0
        %603 = vmatpush1.bf16.msra.mxu0 0
        %604 = vmatprep.subr.bf16.mxu0 0
        %605 = vmatpush1.bf16.msra.mxu0 0
        %606 = vmatprep.subr.bf16.mxu0 0
        %607 = vmatpush1.bf16.msra.mxu0 0
        %608 = vmatprep.subr.bf16.mxu0 0
        %609 = vmatpush1.bf16.msra.mxu0 0
        %610 = vmatprep.subr.bf16.mxu0 0
        %611 = vmatpush1.bf16.msra.mxu0 0
        %612 = vmatprep.subr.bf16.mxu0 0
        %613 = vmatpush1.bf16.msra.mxu0 0
        %614 = vmatprep.subr.bf16.mxu0 0
        %615 = vmatpush1.bf16.msra.mxu0 0
        %616 = vmatprep.subr.bf16.mxu0 0
        %617 = vmatpush1.bf16.msra.mxu0 0
        %618 = vmatprep.subr.bf16.mxu0 0
        %619 = vmatpush1.bf16.msra.mxu0 0
        %620 = vmatprep.subr.bf16.mxu0 0
        %621 = vmatpush1.bf16.msra.mxu0 0
        %622 = vmatprep.subr.bf16.mxu0 0
        %623 = vmatpush1.bf16.msra.mxu0 0
        %624 = vmatprep.subr.bf16.mxu0 0
        %625 = vmatpush1.bf16.msra.mxu0 0
        %626 = vmatprep.subr.bf16.mxu0 0
        %627 = vmatpush1.bf16.msra.mxu0 0
        %628 = vmatprep.mubr.bf16.mxu0 0
        %629 = vmatmul.mubr.bf16.gmra.mrb[0].mxu0 %v594
        %v630 = vpop.f32.mrb[0].mxu0
        %v631 = vadd.f32 0.0, %v630
        %v632 = vpop.f32.mrb[0].mxu0
        %v633 = vpop.f32.mrb[0].mxu0
        %v634 = vadd.f32 0.0, %v633
        %v635 = vpop.f32.mrb[0].mxu0
        %636 = vdwg.mxu0
        %v638 = vsel %vm546, %v592, 0
        %640 = vmatprep.subr.bf16.mxu0 0
        %641 = vmatpush1.bf16.msra.mxu0 %v444
        %642 = vmatprep.subr.bf16.mxu0 0
        %643 = vmatpush1.bf16.msra.mxu0 0
        %644 = vmatprep.subr.bf16.mxu0 0
        %645 = vmatpush1.bf16.msra.mxu0 0
        %646 = vmatprep.subr.bf16.mxu0 0
        %647 = vmatpush1.bf16.msra.mxu0 0
        %648 = vmatprep.subr.bf16.mxu0 0
        %649 = vmatpush1.bf16.msra.mxu0 0
        %650 = vmatprep.subr.bf16.mxu0 0
        %651 = vmatpush1.bf16.msra.mxu0 0
        %652 = vmatprep.subr.bf16.mxu0 0
        %653 = vmatpush1.bf16.msra.mxu0 0
        %654 = vmatprep.subr.bf16.mxu0 0
        %655 = vmatpush1.bf16.msra.mxu0 0
        %656 = vmatprep.subr.bf16.mxu0 0
        %657 = vmatpush1.bf16.msra.mxu0 0
        %658 = vmatprep.subr.bf16.mxu0 0
        %659 = vmatpush1.bf16.msra.mxu0 0
        %660 = vmatprep.subr.bf16.mxu0 0
        %661 = vmatpush1.bf16.msra.mxu0 0
        %662 = vmatprep.subr.bf16.mxu0 0
        %663 = vmatpush1.bf16.msra.mxu0 0
        %664 = vmatprep.subr.bf16.mxu0 0
        %665 = vmatpush1.bf16.msra.mxu0 0
        %666 = vmatprep.subr.bf16.mxu0 0
        %667 = vmatpush1.bf16.msra.mxu0 0
        %668 = vmatprep.subr.bf16.mxu0 0
        %669 = vmatpush1.bf16.msra.mxu0 0
        %670 = vmatprep.subr.bf16.mxu0 0
        %671 = vmatpush1.bf16.msra.mxu0 0
        %672 = vmatprep.mubr.bf16.mxu0 0
        %673 = vmatmul.mubr.bf16.gmra.mrb[0].mxu0 %v638
        %v674 = vpop.f32.mrb[0].mxu0
        %v675 = vadd.f32 0.0, %v674
        %v676 = vpop.f32.mrb[0].mxu0
        %v677 = vpop.f32.mrb[0].mxu0
        %v678 = vadd.f32 0.0, %v677
        %v679 = vpop.f32.mrb[0].mxu0
        %680 = vdwg.mxu0
        %v681 = vpack.c.bf16 %v634, %v631
        %v682 = vpack.c.bf16 %v678, %v675
        %684 = vrot.lane.b32.xlu0 %v439, 96
        %v685 = vpop.permute.xlu0 %684
        %686 = vrot.lane.b32.xlu0 %v441, 32
        %v687 = vpop.permute.xlu0 %686
        %v689 = vsel %vm448, %v685, 0
        %v692 = vsel %vm448, %v687, 0
        %694 = vmatprep.subr.bf16.mxu0 0
        %695 = vmatpush1.bf16.xpose.msra.mxu0 %v692
        %696 = vmatprep.subr.bf16.mxu0 0
        %697 = vmatpush1.bf16.xpose.msra.mxu0 0
        %698 = vmatprep.subr.bf16.mxu0 0
        %699 = vmatpush1.bf16.xpose.msra.mxu0 0
        %700 = vmatprep.subr.bf16.mxu0 0
        %701 = vmatpush1.bf16.xpose.msra.mxu0 0
        %702 = vmatprep.subr.bf16.mxu0 0
        %703 = vmatpush1.bf16.xpose.msra.mxu0 0
        %704 = vmatprep.subr.bf16.mxu0 0
        %705 = vmatpush1.bf16.xpose.msra.mxu0 0
        %706 = vmatprep.subr.bf16.mxu0 0
        %707 = vmatpush1.bf16.xpose.msra.mxu0 0
        %708 = vmatprep.subr.bf16.mxu0 0
        %709 = vmatpush1.bf16.xpose.msra.mxu0 0
        %710 = vmatprep.subr.bf16.mxu0 0
        %711 = vmatpush1.bf16.xpose.msra.mxu0 0
        %712 = vmatprep.subr.bf16.mxu0 0
        %713 = vmatpush1.bf16.xpose.msra.mxu0 0
        %714 = vmatprep.subr.bf16.mxu0 0
        %715 = vmatpush1.bf16.xpose.msra.mxu0 0
        %716 = vmatprep.subr.bf16.mxu0 0
        %717 = vmatpush1.bf16.xpose.msra.mxu0 0
        %718 = vmatprep.subr.bf16.mxu0 0
        %719 = vmatpush1.bf16.xpose.msra.mxu0 0
        %720 = vmatprep.subr.bf16.mxu0 0
        %721 = vmatpush1.bf16.xpose.msra.mxu0 0
        %722 = vmatprep.subr.bf16.mxu0 0
        %723 = vmatpush1.bf16.xpose.msra.mxu0 0
        %724 = vmatprep.subr.bf16.mxu0 0
        %725 = vmatpush1.bf16.xpose.msra.mxu0 0
        %726 = vmatprep.mubr.bf16.mxu0 0
        %727 = vmatmul.mubr.bf16.gmra.mrb[0].mxu0 %v689
        %v728 = vpop.f32.mrb[0].mxu0
        %v729 = vadd.f32 0.0, %v728
        %v730 = vpop.f32.mrb[0].mxu0
        %v731 = vpop.f32.mrb[0].mxu0
        %v732 = vadd.f32 0.0, %v731
        %v733 = vpop.f32.mrb[0].mxu0
        %734 = vdwg.mxu0
        %736 = vrot.lane.b32.xlu0 %v440, 96
        %v737 = vpop.permute.xlu0 %736
        %738 = vrot.lane.b32.xlu0 %v442, 32
        %v739 = vpop.permute.xlu0 %738
        %v741 = vsel %vm448, %v737, 0
        %v744 = vsel %vm448, %v739, 0
        %746 = vmatprep.subr.bf16.mxu0 0
        %747 = vmatpush1.bf16.xpose.msra.mxu0 %v744
        %748 = vmatprep.subr.bf16.mxu0 0
        %749 = vmatpush1.bf16.xpose.msra.mxu0 0
        %750 = vmatprep.subr.bf16.mxu0 0
        %751 = vmatpush1.bf16.xpose.msra.mxu0 0
        %752 = vmatprep.subr.bf16.mxu0 0
        %753 = vmatpush1.bf16.xpose.msra.mxu0 0
        %754 = vmatprep.subr.bf16.mxu0 0
        %755 = vmatpush1.bf16.xpose.msra.mxu0 0
        %756 = vmatprep.subr.bf16.mxu0 0
        %757 = vmatpush1.bf16.xpose.msra.mxu0 0
        %758 = vmatprep.subr.bf16.mxu0 0
        %759 = vmatpush1.bf16.xpose.msra.mxu0 0
        %760 = vmatprep.subr.bf16.mxu0 0
        %761 = vmatpush1.bf16.xpose.msra.mxu0 0
        %762 = vmatprep.subr.bf16.mxu0 0
        %763 = vmatpush1.bf16.xpose.msra.mxu0 0
        %764 = vmatprep.subr.bf16.mxu0 0
        %765 = vmatpush1.bf16.xpose.msra.mxu0 0
        %766 = vmatprep.subr.bf16.mxu0 0
        %767 = vmatpush1.bf16.xpose.msra.mxu0 0
        %768 = vmatprep.subr.bf16.mxu0 0
        %769 = vmatpush1.bf16.xpose.msra.mxu0 0
        %770 = vmatprep.subr.bf16.mxu0 0
        %771 = vmatpush1.bf16.xpose.msra.mxu0 0
        %772 = vmatprep.subr.bf16.mxu0 0
        %773 = vmatpush1.bf16.xpose.msra.mxu0 0
        %774 = vmatprep.subr.bf16.mxu0 0
        %775 = vmatpush1.bf16.xpose.msra.mxu0 0
        %776 = vmatprep.subr.bf16.mxu0 0
        %777 = vmatpush1.bf16.xpose.msra.mxu0 0
        %778 = vmatprep.mubr.bf16.mxu0 0
        %779 = vmatmul.mubr.bf16.gmra.mrb[0].mxu0 %v741
        %v780 = vpop.f32.mrb[0].mxu0
        %v781 = vadd.f32 0.0, %v780
        %v782 = vpop.f32.mrb[0].mxu0
        %v783 = vpop.f32.mrb[0].mxu0
        %v784 = vadd.f32 0.0, %v783
        %v785 = vpop.f32.mrb[0].mxu0
        %786 = vdwg.mxu0
        %v787 = vsel %vm546, %v729, -inf
        %788 = vmax.xlane.f32.xlu0 %v787
        %v789 = vpop.xlane.xlu0 %788
        %v790 = vsel %vm546, %v732, -inf
        %791 = vmax.xlane.f32.xlu0 %v790
        %v792 = vpop.xlane.xlu0 %791
        %v793 = vsel %vm546, %v781, -inf
        %794 = vmax.xlane.f32.xlu0 %v793
        %v795 = vpop.xlane.xlu0 %794
        %v796 = vsel %vm546, %v784, -inf
        %797 = vmax.xlane.f32.xlu0 %v796
        %v798 = vpop.xlane.xlu0 %797
        %v799 = vsub.f32 %v729, %v789
        %v800 = vsub.f32 %v732, %v792
        %v801 = vsub.f32 %v781, %v795
        %v802 = vsub.f32 %v784, %v798
        %v803 = vmul.f32 %v799, 1.442695
        %v804 = vpow.pop %v803
        %v805 = vmul.f32 %v800, 1.442695
        %v806 = vpow.pop %v805
        %v807 = vmul.f32 %v801, 1.442695
        %v808 = vpow.pop %v807
        %v809 = vmul.f32 %v802, 1.442695
        %v810 = vpow.pop %v809
        %v811 = vsel %vm546, %v804, 0.0
        %812 = vadd.xlane.f32.xlu0 %v811
        %v813 = vpop.xlane.xlu0 %812
        %v814 = vsel %vm546, %v806, 0.0
        %815 = vadd.xlane.f32.xlu0 %v814
        %v816 = vpop.xlane.xlu0 %815
        %v817 = vsel %vm546, %v808, 0.0
        %818 = vadd.xlane.f32.xlu0 %v817
        %v819 = vpop.xlane.xlu0 %818
        %v820 = vsel %vm546, %v810, 0.0
        %821 = vadd.xlane.f32.xlu0 %v820
        %v822 = vpop.xlane.xlu0 %821
        %v823 = vrcp.pop %v813
        %v824 = vrcp.pop %v816
        %v825 = vrcp.pop %v819
        %v826 = vrcp.pop %v822
        %v827 = vmul.f32 %v804, %v823
        %v828 = vmul.f32 %v806, %v824
        %v829 = vmul.f32 %v808, %v825
        %v830 = vmul.f32 %v810, %v826
        %v831 = vpack.c.bf16 %v828, %v827
        %v832 = vpack.c.bf16 %v830, %v829
        %834 = vrot.lane.b32.xlu0 %v443, 96
        %v835 = vpop.permute.xlu0 %834
        %v838 = vsel %vm546, %v831, 0
        %840 = vmatprep.subr.bf16.mxu0 0
        %841 = vmatpush1.bf16.msra.mxu0 %v835
        %842 = vmatprep.subr.bf16.mxu0 0
        %843 = vmatpush1.bf16.msra.mxu0 0
        %844 = vmatprep.subr.bf16.mxu0 0
        %845 = vmatpush1.bf16.msra.mxu0 0
        %846 = vmatprep.subr.bf16.mxu0 0
        %847 = vmatpush1.bf16.msra.mxu0 0
        %848 = vmatprep.subr.bf16.mxu0 0
        %849 = vmatpush1.bf16.msra.mxu0 0
        %850 = vmatprep.subr.bf16.mxu0 0
        %851 = vmatpush1.bf16.msra.mxu0 0
        %852 = vmatprep.subr.bf16.mxu0 0
        %853 = vmatpush1.bf16.msra.mxu0 0
        %854 = vmatprep.subr.bf16.mxu0 0
        %855 = vmatpush1.bf16.msra.mxu0 0
        %856 = vmatprep.subr.bf16.mxu0 0
        %857 = vmatpush1.bf16.msra.mxu0 0
        %858 = vmatprep.subr.bf16.mxu0 0
        %859 = vmatpush1.bf16.msra.mxu0 0
        %860 = vmatprep.subr.bf16.mxu0 0
        %861 = vmatpush1.bf16.msra.mxu0 0
        %862 = vmatprep.subr.bf16.mxu0 0
        %863 = vmatpush1.bf16.msra.mxu0 0
        %864 = vmatprep.subr.bf16.mxu0 0
        %865 = vmatpush1.bf16.msra.mxu0 0
        %866 = vmatprep.subr.bf16.mxu0 0
        %867 = vmatpush1.bf16.msra.mxu0 0
        %868 = vmatprep.subr.bf16.mxu0 0
        %869 = vmatpush1.bf16.msra.mxu0 0
        %870 = vmatprep.subr.bf16.mxu0 0
        %871 = vmatpush1.bf16.msra.mxu0 0
        %872 = vmatprep.mubr.bf16.mxu0 0
        %873 = vmatmul.mubr.bf16.gmra.mrb[0].mxu0 %v838
        %v874 = vpop.f32.mrb[0].mxu0
        %v875 = vadd.f32 0.0, %v874
        %v876 = vpop.f32.mrb[0].mxu0
        %v877 = vpop.f32.mrb[0].mxu0
        %v878 = vadd.f32 0.0, %v877
        %v879 = vpop.f32.mrb[0].mxu0
        %880 = vdwg.mxu0
        %882 = vrot.lane.b32.xlu0 %v444, 96
        %v883 = vpop.permute.xlu0 %882
        %v886 = vsel %vm546, %v832, 0
        %888 = vmatprep.subr.bf16.mxu0 0
        %889 = vmatpush1.bf16.msra.mxu0 %v883
        %890 = vmatprep.subr.bf16.mxu0 0
        %891 = vmatpush1.bf16.msra.mxu0 0
        %892 = vmatprep.subr.bf16.mxu0 0
        %893 = vmatpush1.bf16.msra.mxu0 0
        %894 = vmatprep.subr.bf16.mxu0 0
        %895 = vmatpush1.bf16.msra.mxu0 0
        %896 = vmatprep.subr.bf16.mxu0 0
        %897 = vmatpush1.bf16.msra.mxu0 0
        %898 = vmatprep.subr.bf16.mxu0 0
        %899 = vmatpush1.bf16.msra.mxu0 0
        %900 = vmatprep.subr.bf16.mxu0 0
        %901 = vmatpush1.bf16.msra.mxu0 0
        %902 = vmatprep.subr.bf16.mxu0 0
        %903 = vmatpush1.bf16.msra.mxu0 0
        %904 = vmatprep.subr.bf16.mxu0 0
        %905 = vmatpush1.bf16.msra.mxu0 0
        %906 = vmatprep.subr.bf16.mxu0 0
        %907 = vmatpush1.bf16.msra.mxu0 0
        %908 = vmatprep.subr.bf16.mxu0 0
        %909 = vmatpush1.bf16.msra.mxu0 0
        %910 = vmatprep.subr.bf16.mxu0 0
        %911 = vmatpush1.bf16.msra.mxu0 0
        %912 = vmatprep.subr.bf16.mxu0 0
        %913 = vmatpush1.bf16.msra.mxu0 0
        %914 = vmatprep.subr.bf16.mxu0 0
        %915 = vmatpush1.bf16.msra.mxu0 0
        %916 = vmatprep.subr.bf16.mxu0 0
        %917 = vmatpush1.bf16.msra.mxu0 0
        %918 = vmatprep.subr.bf16.mxu0 0
        %919 = vmatpush1.bf16.msra.mxu0 0
        %920 = vmatprep.mubr.bf16.mxu0 0
        %921 = vmatmul.mubr.bf16.gmra.mrb[0].mxu0 %v886
        %v922 = vpop.f32.mrb[0].mxu0
        %v923 = vadd.f32 0.0, %v922
        %v924 = vpop.f32.mrb[0].mxu0
        %v925 = vpop.f32.mrb[0].mxu0
        %v926 = vadd.f32 0.0, %v925
        %v927 = vpop.f32.mrb[0].mxu0
        %928 = vdwg.mxu0
        %v929 = vpack.c.bf16 %v878, %v875
        %v930 = vpack.c.bf16 %v926, %v923
        %933 = vrot.lane.b32.xlu0 %v929, 32
        %v934 = vpop.permute.xlu0 %933
        %935 = vrot.lane.b32.xlu0 %v930, 32
        %v936 = vpop.permute.xlu0 %935
        %v939 = vsel %vm448, %v681, %v934
        %v942 = vsel %vm448, %v682, %v936
        %v943 = vld [vmem:[#allocation8] sm:$0xf]
        %v944 = vld [vmem:[#allocation8 + $0x4] sm:$0xf]
        %v945 = vld [vmem:[#allocation8 + $0x8] sm:$0xf]
        %v946 = vld [vmem:[#allocation8 + $0xc] sm:$0xf]
        %v947 = vld [vmem:[#allocation8 + $0x10] sm:$0xf]
        %v948 = vld [vmem:[#allocation8 + $0x14] sm:$0xf]
        %v949 = vld [vmem:[#allocation8 + $0x18] sm:$0xf]
        %v950 = vld [vmem:[#allocation8 + $0x1c] sm:$0xf]
        %v951 = vld [vmem:[#allocation10] sm:$0x1]
        %v953 = vlaneseq
        %v954 = vshrl.u32 %v953, 7
        %v955 = vsub.s32 0, %v954
        %v956 = vrot.slane %v951, %v955
        %v966 = vunpack.c.l.b16 %v943
        %v967 = vunpack.c.l.b16 %v944
        %v968 = vunpack.c.l.b16 %v945
        %v969 = vunpack.c.l.b16 %v946
        %v970 = vunpack.c.l.b16 %v947
        %v971 = vunpack.c.l.b16 %v948
        %v972 = vunpack.c.l.b16 %v949
        %v973 = vunpack.c.l.b16 %v950
        %v974 = vpack.c.b16 %v967, %v966
        %v975 = vpack.c.b16 %v969, %v968
        %v976 = vpack.c.b16 %v971, %v970
        %v977 = vpack.c.b16 %v973, %v972
        %v982 = vsel %vm375, %v939, 0
        %v984 = vsel %vm375, %v942, 0
        %986 = vmatprep.subr.bf16.mxu0 0
        %987 = vmatpush1.bf16.msra.mxu0 %v974
        %988 = vmatprep.subr.bf16.mxu0 0
        %989 = vmatpush1.bf16.msra.mxu0 %v975
        %990 = vmatprep.subr.bf16.mxu0 0
        %991 = vmatpush1.bf16.msra.mxu0 %v976
        %992 = vmatprep.subr.bf16.mxu0 0
        %993 = vmatpush1.bf16.msra.mxu0 %v977
        %994 = vmatprep.subr.bf16.mxu0 0
        %995 = vmatpush1.bf16.msra.mxu0 0
        %996 = vmatprep.subr.bf16.mxu0 0
        %997 = vmatpush1.bf16.msra.mxu0 0
        %998 = vmatprep.subr.bf16.mxu0 0
        %999 = vmatpush1.bf16.msra.mxu0 0
        %1000 = vmatprep.subr.bf16.mxu0 0
        %1001 = vmatpush1.bf16.msra.mxu0 0
        %1002 = vmatprep.subr.bf16.mxu0 0
        %1003 = vmatpush1.bf16.msra.mxu0 0
        %1004 = vmatprep.subr.bf16.mxu0 0
        %1005 = vmatpush1.bf16.msra.mxu0 0
        %1006 = vmatprep.subr.bf16.mxu0 0
        %1007 = vmatpush1.bf16.msra.mxu0 0
        %1008 = vmatprep.subr.bf16.mxu0 0
        %1009 = vmatpush1.bf16.msra.mxu0 0
        %1010 = vmatprep.subr.bf16.mxu0 0
        %1011 = vmatpush1.bf16.msra.mxu0 0
        %1012 = vmatprep.subr.bf16.mxu0 0
        %1013 = vmatpush1.bf16.msra.mxu0 0
        %1014 = vmatprep.subr.bf16.mxu0 0
        %1015 = vmatpush1.bf16.msra.mxu0 0
        %1016 = vmatprep.subr.bf16.mxu0 0
        %1017 = vmatpush1.bf16.msra.mxu0 0
        %1018 = vmatprep.mubr.bf16.mxu0 0
        %1019 = vmatmul.mubr.bf16.gmra.mrb[0].mxu0 %v982
        %v1020 = vpop.f32.mrb[0].mxu0
        %v1021 = vadd.f32 %v956, %v1020
        %v1022 = vpop.f32.mrb[0].mxu0
        %v1023 = vpop.f32.mrb[0].mxu0
        %v1024 = vadd.f32 %v956, %v1023
        %v1025 = vpop.f32.mrb[0].mxu0
        %1026 = vmatprep.mubr.bf16.mxu0 0
        %1027 = vmatmul.mubr.bf16.gmra.mrb[0].mxu0 %v984
        %v1028 = vpop.f32.mrb[0].mxu0
        %v1029 = vadd.f32 %v956, %v1028
        %v1030 = vpop.f32.mrb[0].mxu0
        %v1031 = vpop.f32.mrb[0].mxu0
        %v1032 = vadd.f32 %v956, %v1031
        %v1033 = vpop.f32.mrb[0].mxu0
        %1034 = vdwg.mxu0
        %1035 = vst.msk [vmem:[%s297] sm:$0xff] %vm375, %v1021
        %1036 = vst.msk [vmem:[%s297 + $0x8] sm:$0xff] %vm375, %v1024
        %1037 = vst.msk [vmem:[%s297 + $0x10] sm:$0xff] %vm375, %v1029
        %1038 = vst.msk [vmem:[%s297 + $0x18] sm:$0xff] %vm375, %v1032
        %s1039 = sand.u32 %s142, 1
        %s1040 = scalar_lea.sflag [#allocation4], %s1039
        %s1041 = sand.u32 %s142, 1
        %s1042 = smul.addr %s1041, 32
        %s1043 = scalar_lea.vmem [#allocation11], %s1042
        // Predicated region
        $region61: #{tpu_custom_call.1} parent=39 // pred_check
          %p1044 = pneg %p152
        $region62: #{tpu_custom_call.1} parent=39 // pred_check_branch
          %1046 = sbr.rel (%p1044) target = $region64
        $region63: #{tpu_custom_call.1} parent=39 // pred_region
          %s1047 = smul.u32 2, %s24
          %s1049 = ssub.s32 512, 512
          %1050 = vsyncadd %s1040, %s1049
          %s1051 = smul.addr %s1047, 2
          %s1052 = smul.addr %s1051, 128
          %s1053 = scalar_lea.hbm %s5, %s1052
          %s1054 = sshll.u32 %s1043, 4
          %s1055 = int_to_ptr.vmem [resolvable:$true] %s1054
          %1060 = dma.vmem_to_hbm [thread:$0]  %s1055, 512, %s1053, %s1040, 128, 128, 8
        $region64: #{tpu_custom_call.1} parent=39 // pred_fallthru
          _
      $region40: #{tpu_custom_call.1} parent=5 // pred_fallthru
        _
      %p1061 = scmp.le.s32.totalorder 2, %s19
      // Predicated region
      $region65: #{tpu_custom_call.1} parent=5 // pred_check
        %p1062 = pneg %p1061
      $region66: #{tpu_custom_call.1} parent=5 // pred_check_branch
        %1064 = sbr.rel (%p1062) target = $region68
      $region67: #{tpu_custom_call.1} parent=5 // pred_region
        %s1065 = ssub.s32 %s19, 2
        // Predicated region
        $region69: #{tpu_custom_call.1} parent=67 // pred_check
          %p1066 = pneg %p158
        $region70: #{tpu_custom_call.1} parent=67 // pred_check_branch
          %1068 = sbr.rel (%p1066) target = $region72
        $region71: #{tpu_custom_call.1} parent=67 // pred_region
          %s1069 = sand.u32 %s143, 1
          %s1070 = scalar_lea.sflag [#allocation4], %s1069
          %s1071 = sand.u32 %s143, 1
          %s1072 = smul.addr %s1071, 32
          %s1073 = scalar_lea.vmem [#allocation11], %s1072
          %1074 = dma.done %s1070, 512
        $region72: #{tpu_custom_call.1} parent=67 // pred_fallthru
          _
      $region68: #{tpu_custom_call.1} parent=5 // pred_fallthru
        _
    $region6: #{tpu_custom_call.1} parent=1 // loop_footer
      %s23 = sadd.s32 1, %s19
    $region7: #{tpu_custom_call.1} parent=1 // loop_footer_branch
      %18 = sbr.rel target = $region3
    $region8: #{tpu_custom_call.1} parent=1 // loop_exit
      _
    %1075 = vsyncpa [#allocation3], 1
    %s1076 = scalar_lea.sflag [#allocation3], 1
    %1077 = vsyncpa %s1076, 1
    %1078 = vsyncpa [#allocation6], 1
    %1079 = vsyncpa [#allocation9], 1
    %1080 = vsyncpa [#allocation4], 1
    %s1081 = scalar_lea.sflag [#allocation4], 1
    %1082 = vsyncpa %s1081, 1

</llo_original>
